<compile_context>
chip_gen: v6e
topology: v6e:2x2x1
jax: 0.10.0
libtpu: 0.0.40
codegen_flags: <defaults>
</compile_context>

<pallas_src>
import functools

import jax
import jax.numpy as jnp
from jax import lax
from jax.experimental import pallas as pl
from jax.experimental.pallas import tpu as pltpu

_LANE = 128                 # TPU lane width
_OUT_PAD = 3 * _LANE        # padded fc_3 output width (260 -> 384)
_ROW_VMEM_BYTES = 6 * 1024  # conservative per-(b,s)-row VMEM footprint (io + f32 temps)
_VMEM_BUDGET = 24 << 20     # v7x-safe budget used to derive tile_s
_VMEM_LIMIT = 32 << 20      # scoped-VMEM limit handed to the compiler


def fc3_padded_layout(M):
    """chunk index (original model order) -> start column in the padded 384 layout."""
    return {
        0: 0 * M,            # pi           (slab 0: exp / softmax)
        3: 1 * M,            # sigma_x
        4: 2 * M,            # sigma_y
        8: 3 * M,            # sigma_a
        9: 4 * M,            # sigma_b
        12: 5 * M,           # sigma_slope
        1: _LANE + 0 * M,    # mu_x         (slab 1: sigmoid / tanh)
        2: _LANE + 1 * M,    # mu_y
        6: _LANE + 2 * M,    # mu_a
        7: _LANE + 3 * M,    # mu_b
        11: _LANE + 4 * M,   # mu_slope
        5: _LANE + 5 * M,    # rho_xy
        10: 2 * _LANE,       # rho_ab       (slab 2: tanh)
    }


def _mlp_decoder_kernel(x_ref, w1_ref, b1_ref, w2_ref, b2_ref, w3_ref, b3_ref,
                        out_ref, *, B, T, M):
    # The batch dim is NEVER tiled: pi's softmax is over dim 0, so every block
    # must carry the full batch.  (Do not shard B if VMEM gets tight; shrink T.)
    R = B * T
    F = x_ref.shape[-1]

    # ---- fused MLP hot path: bf16 MXU matmuls with f32 accumulation ----
    # f32 feature straight from HBM, cast to bf16 on the VPU (free; no extra HBM pass).
    x = x_ref[...].astype(jnp.bfloat16).reshape(R, F)
    h1 = jnp.dot(x, w1_ref[...], preferred_element_type=jnp.float32) + b1_ref[...]
    h1 = jnp.maximum(h1, 0.0).astype(jnp.bfloat16)
    h2 = jnp.dot(h1, w2_ref[...], preferred_element_type=jnp.float32) + b2_ref[...]
    h2 = jnp.maximum(h2, 0.0).astype(jnp.bfloat16)
    y = jnp.dot(h2, w3_ref[...], preferred_element_type=jnp.float32) + b3_ref[...]
    # y: (R, 384) f32, permuted + zero-padded fc_3 layout (see fc3_padded_layout).

    # ---- slab 0: pi softmax over the batch dim + all sigma exps, ONE exp pass ----
    yA = y[:, 0:_LANE].reshape(B, T, _LANE)
    laneA = lax.broadcasted_iota(jnp.int32, (1, 1, _LANE), 2)
    pi_m = laneA < M
    m = jnp.max(yA, axis=0, keepdims=True)           # (1,T,128): reduce over batch (VPU)
    shift = jnp.where(pi_m, m, 0.0)                  # only shift the pi lanes
    e = jnp.exp(yA - shift)                          # single EUP exp pass
    den = jnp.sum(e, axis=0, keepdims=True)
    inv = pl.reciprocal(den)                         # exact -> pi stays normalized
    out_ref[:, :, 0:_LANE] = jnp.where(pi_m, e * inv, e).astype(out_ref.dtype)

    # ---- slab 1: sigmoid (mu_*) + tanh (rho_xy), ONE tanh pass ----
    yB = y[:, _LANE:2 * _LANE]
    laneB = lax.broadcasted_iota(jnp.int32, (1, _LANE), 1)
    tanh_m = (laneB >= 5 * M) & (laneB < 6 * M)      # rho_xy lanes (range compare)
    tB = jnp.tanh(jnp.where(tanh_m, yB, 0.5 * yB))   # sigmoid(x)=0.5*(1+tanh(x/2))
    outB = jnp.where(tanh_m, tB, 0.5 * (tB + 1.0))
    out_ref[:, :, _LANE:2 * _LANE] = outB.reshape(B, T, _LANE).astype(out_ref.dtype)

    # ---- slab 2: tanh (rho_ab) + zero padding ----
    out_ref[:, :, 2 * _LANE:3 * _LANE] = jnp.tanh(
        y[:, 2 * _LANE:3 * _LANE]).reshape(B, T, _LANE).astype(out_ref.dtype)


def init_params(key, n_feature=128, M=20):
    """Deterministic parameter init (matches PyTorch Linear shapes, fan-in uniform)."""
    ks = jax.random.split(key, 6)

    def linear(kw, kb, fan_in, fan_out):
        bound = 1.0 / float(fan_in) ** 0.5
        w = jax.random.uniform(kw, (fan_in, fan_out), jnp.float32, -bound, bound)
        b = jax.random.uniform(kb, (1, fan_out), jnp.float32, -bound, bound)
        return w, b

    w1, b1 = linear(ks[0], ks[1], n_feature, n_feature)
    w2, b2 = linear(ks[2], ks[3], n_feature, n_feature // 2)
    w3, b3 = linear(ks[4], ks[5], n_feature // 2, 13 * M)
    return (w1, b1, w2, b2, w3, b3)


def prepare_decoder_params(params, M=20):
    """One-time prep (hoisted out of the forward path): permute + zero-pad fc_3 into
    the lane-dense 384-wide layout and cast the MXU-side weights to bf16."""
    w1, b1, w2, b2, w3, b3 = params
    f2 = w3.shape[0]
    w3p = jnp.zeros((f2, _OUT_PAD), w3.dtype)
    b3p = jnp.zeros((1, _OUT_PAD), b3.dtype)
    for c, s in fc3_padded_layout(M).items():
        w3p = w3p.at[:, s:s + M].set(w3[:, c * M:(c + 1) * M])
        b3p = b3p.at[:, s:s + M].set(b3[:, c * M:(c + 1) * M])
    return (w1.astype(jnp.bfloat16), b1,
            w2.astype(jnp.bfloat16), b2,
            w3p.astype(jnp.bfloat16), b3p)


def _pick_tile_s(S, B):
    """B-aware S tile: ~2-4 MB of output per grid step, capped by a v7x-safe VMEM
    budget, with >= 2 grid steps (megacore) whenever S is large enough."""
    if S <= 32:
        return S                                   # tiny S: single full tile
    rows_cap = min(4096, _VMEM_BUDGET // _ROW_VMEM_BYTES)   # rows per grid step
    t = max(16, (rows_cap // max(B, 1)) // 16 * 16)
    t = min(t, max(16, (S // 2) // 16 * 16))       # guarantee >= 2 grid steps
    return min(t, S)


@functools.partial(jax.jit, static_argnames=("M", "return_padded"))
def mlp_decoder_forward(feature, prepared_params, M=20, return_padded=False):
    """feature: (B, S, n_feature) float32.

    Returns the 13 (B, S, M) parameter arrays (original model order) as f32.  Callers
    that can consume the lane-dense layout directly should pass return_padded=True to
    get the raw (B, S, 384) bf16 kernel output (column map: fc3_padded_layout(M)) and
    skip the un-permute materialization entirely.
    """
    B, S, F = feature.shape
    w1, b1, w2, b2, w3p, b3p = prepared_params
    assert 6 * M <= _LANE, "padded slab layout assumes 6*M <= 128 (M <= 21)"

    tile_s = _pick_tile_s(S, B)
    grid = (pl.cdiv(S, tile_s),)                   # masked final tile if S % tile_s != 0
    kernel = functools.partial(_mlp_decoder_kernel, B=B, T=tile_s, M=M)

    y_p = pl.pallas_call(
        kernel,
        out_shape=jax.ShapeDtypeStruct((B, S, _OUT_PAD), jnp.bfloat16),
        grid=grid,
        in_specs=[
            pl.BlockSpec((B, tile_s, F), lambda i: (0, i, 0)),      # x (f32), tiled over S
            pl.BlockSpec((F, F), lambda i: (0, 0)),                 # w1 (bf16, resident)
            pl.BlockSpec((1, F), lambda i: (0, 0)),                 # b1 (f32)
            pl.BlockSpec((F, F // 2), lambda i: (0, 0)),            # w2
            pl.BlockSpec((1, F // 2), lambda i: (0, 0)),            # b2
            pl.BlockSpec((F // 2, _OUT_PAD), lambda i: (0, 0)),     # w3 (permuted+padded)
            pl.BlockSpec((1, _OUT_PAD), lambda i: (0, 0)),          # b3 (permuted+padded)
        ],
        out_specs=pl.BlockSpec((B, tile_s, _OUT_PAD), lambda i: (0, i, 0)),
        compiler_params=pltpu.CompilerParams(
            dimension_semantics=("parallel",),     # shard S tiles across TCs on v7x
            vmem_limit_bytes=_VMEM_LIMIT,
        ),
    )(feature, w1, b1, w2, b2, w3p, b3p)

    if return_padded:
        return y_p

    # Un-permute inside this jit so the 13 slices fuse; returned as f32 (module dtype).
    starts = fc3_padded_layout(M)
    return [y_p[:, :, starts[c]:starts[c] + M].astype(jnp.float32) for c in range(13)]


def mlp_decoder_reference(feature, params, M=20):
    """Pure-JAX f32 reference reproducing the PyTorch forward (incl. dim=0 softmax)."""
    w1, b1, w2, b2, w3, b3 = params
    h1 = jnp.maximum(feature @ w1 + b1[0], 0.0)
    h2 = jnp.maximum(h1 @ w2 + b2[0], 0.0)
    y = h2 @ w3 + b3[0]
    c = [y[:, :, i * M:(i + 1) * M] for i in range(13)]
    sig = jax.nn.sigmoid
    return [
        jax.nn.softmax(c[0], axis=0),       # pi (legacy implicit dim=0 on a 3-D tensor)
        sig(c[1]), sig(c[2]),               # mu_x, mu_y
        jnp.exp(c[3]), jnp.exp(c[4]),       # sigma_x, sigma_y
        jnp.tanh(c[5]),                     # rho_xy
        sig(c[6]), sig(c[7]),               # mu_a, mu_b
        jnp.exp(c[8]), jnp.exp(c[9]),       # sigma_a, sigma_b
        jnp.tanh(c[10]),                    # rho_ab
        sig(c[11]),                         # mu_slope
        jnp.exp(c[12]),                     # sigma_slope
    ]


if __name__ == "__main__":
    B, S, n_feature, M = 2, 8, 128, 20
    key = jax.random.PRNGKey(0)
    k_x, k_p = jax.random.split(key)

    feature = jax.random.normal(k_x, (B, S, n_feature), dtype=jnp.float32)
    params = init_params(k_p, n_feature=n_feature, M=M)
    prepared = prepare_decoder_params(params, M=M)   # hoisted one-time weight prep

    outs = jax.block_until_ready(mlp_decoder_forward(feature, prepared, M=M))
    refs = jax.block_until_ready(mlp_decoder_reference(feature, params, M=M))

    assert len(outs) == 13
    assert all(o.shape == (B, S, M) for o in outs)

    # pi is a softmax over the BATCH dim (PyTorch implicit dim=0 on a 3-D tensor).
    pi_sum = jnp.sum(outs[0], axis=0)
    assert bool(jnp.all(jnp.abs(pi_sum - 1.0) < 1e-2)), "pi not normalized over batch"

    # bf16 matmuls + bf16 output storage -> loose-but-meaningful tolerance vs f32 ref.
    for o, r in zip(outs, refs):
        assert bool(jnp.all(jnp.abs(o - r) <= 3e-2 + 3e-2 * jnp.abs(r))), \
            "mismatch vs f32 reference"

    print("KERNEL_OK")
</pallas_src>

<mosaic_0001>
module attributes {stable_mosaic.version = 11 : i64} {
  func.func @_mlp_decoder_kernel(%arg0: i32, %arg1: memref<2x8x128xf32, #tpu.memory_space<vmem>>, %arg2: memref<128x128xbf16, #tpu.memory_space<vmem>>, %arg3: memref<1x128xf32, #tpu.memory_space<vmem>>, %arg4: memref<128x64xbf16, #tpu.memory_space<vmem>>, %arg5: memref<1x64xf32, #tpu.memory_space<vmem>>, %arg6: memref<64x384xbf16, #tpu.memory_space<vmem>>, %arg7: memref<1x384xf32, #tpu.memory_space<vmem>>, %arg8: memref<2x8x384xbf16, #tpu.memory_space<vmem>>) attributes {dimension_semantics = [#tpu.dimension_semantics<parallel>], iteration_bounds = array<i64: 1>, scalar_prefetch = 0 : i64, scratch_operands = 0 : i64, tpu.core_type = #tpu.core_type<tc>, window_params = [{transform_indices = @transform_0, window_bounds = array<i64: 2, 8, 128>}, {pipeline_mode = #tpu.pipeline_mode<synchronous>, transform_indices = @transform_1, window_bounds = array<i64: 128, 128>}, {pipeline_mode = #tpu.pipeline_mode<synchronous>, transform_indices = @transform_2, window_bounds = array<i64: 1, 128>}, {pipeline_mode = #tpu.pipeline_mode<synchronous>, transform_indices = @transform_3, window_bounds = array<i64: 128, 64>}, {pipeline_mode = #tpu.pipeline_mode<synchronous>, transform_indices = @transform_4, window_bounds = array<i64: 1, 64>}, {pipeline_mode = #tpu.pipeline_mode<synchronous>, transform_indices = @transform_5, window_bounds = array<i64: 64, 384>}, {pipeline_mode = #tpu.pipeline_mode<synchronous>, transform_indices = @transform_6, window_bounds = array<i64: 1, 384>}, {transform_indices = @transform_7, window_bounds = array<i64: 2, 8, 384>}]} {
    %c0 = arith.constant 0 : index
    %c0_0 = arith.constant 0 : index
    %c0_1 = arith.constant 0 : index
    %0 = vector.load %arg1[%c0, %c0_0, %c0_1] : memref<2x8x128xf32, #tpu.memory_space<vmem>>, vector<2x8x128xf32>
    %1 = arith.truncf %0 : vector<2x8x128xf32> to vector<2x8x128xbf16>
    %2 = vector.shape_cast %1 : vector<2x8x128xbf16> to vector<16x128xbf16>
    %c0_2 = arith.constant 0 : index
    %c0_3 = arith.constant 0 : index
    %3 = vector.load %arg2[%c0_2, %c0_3] : memref<128x128xbf16, #tpu.memory_space<vmem>>, vector<128x128xbf16>
    %cst = arith.constant dense<0.000000e+00> : vector<16x128xf32>
    %4 = tpu.matmul %2, %3, %cst {dimension_numbers = #tpu.dot_dimension_numbers<[1], [0], [0], [1], [0, 0, 1, 1], [], []>} : vector<16x128xbf16>, vector<128x128xbf16>, vector<16x128xf32> -> vector<16x128xf32>
    %c0_4 = arith.constant 0 : index
    %c0_5 = arith.constant 0 : index
    %5 = vector.load %arg3[%c0_4, %c0_5] : memref<1x128xf32, #tpu.memory_space<vmem>>, vector<1x128xf32>
    %6 = vector.broadcast %5 : vector<1x128xf32> to vector<16x128xf32>
    %7 = arith.addf %4, %6 : vector<16x128xf32>
    %cst_6 = arith.constant 0.000000e+00 : f32
    %8 = vector.broadcast %cst_6 : f32 to vector<16x128xf32>
    %9 = arith.maximumf %7, %8 : vector<16x128xf32>
    %10 = arith.truncf %9 : vector<16x128xf32> to vector<16x128xbf16>
    %c0_7 = arith.constant 0 : index
    %c0_8 = arith.constant 0 : index
    %11 = vector.load %arg4[%c0_7, %c0_8] : memref<128x64xbf16, #tpu.memory_space<vmem>>, vector<128x64xbf16>
    %cst_9 = arith.constant dense<0.000000e+00> : vector<16x64xf32>
    %12 = tpu.matmul %10, %11, %cst_9 {dimension_numbers = #tpu.dot_dimension_numbers<[1], [0], [0], [1], [0, 0, 1, 1], [], []>} : vector<16x128xbf16>, vector<128x64xbf16>, vector<16x64xf32> -> vector<16x64xf32>
    %c0_10 = arith.constant 0 : index
    %c0_11 = arith.constant 0 : index
    %13 = vector.load %arg5[%c0_10, %c0_11] : memref<1x64xf32, #tpu.memory_space<vmem>>, vector<1x64xf32>
    %14 = vector.broadcast %13 : vector<1x64xf32> to vector<16x64xf32>
    %15 = arith.addf %12, %14 : vector<16x64xf32>
    %cst_12 = arith.constant 0.000000e+00 : f32
    %16 = vector.broadcast %cst_12 : f32 to vector<16x64xf32>
    %17 = arith.maximumf %15, %16 : vector<16x64xf32>
    %18 = arith.truncf %17 : vector<16x64xf32> to vector<16x64xbf16>
    %c0_13 = arith.constant 0 : index
    %c0_14 = arith.constant 0 : index
    %19 = vector.load %arg6[%c0_13, %c0_14] : memref<64x384xbf16, #tpu.memory_space<vmem>>, vector<64x384xbf16>
    %cst_15 = arith.constant dense<0.000000e+00> : vector<16x384xf32>
    %20 = tpu.matmul %18, %19, %cst_15 {dimension_numbers = #tpu.dot_dimension_numbers<[1], [0], [0], [1], [0, 0, 1, 1], [], []>} : vector<16x64xbf16>, vector<64x384xbf16>, vector<16x384xf32> -> vector<16x384xf32>
    %c0_16 = arith.constant 0 : index
    %c0_17 = arith.constant 0 : index
    %21 = vector.load %arg7[%c0_16, %c0_17] : memref<1x384xf32, #tpu.memory_space<vmem>>, vector<1x384xf32>
    %22 = vector.broadcast %21 : vector<1x384xf32> to vector<16x384xf32>
    %23 = arith.addf %20, %22 : vector<16x384xf32>
    %24 = vector.extract_strided_slice %23 {offsets = [0, 0], sizes = [16, 128], strides = [1, 1]} : vector<16x384xf32> to vector<16x128xf32>
    %25 = vector.shape_cast %24 : vector<16x128xf32> to vector<2x8x128xf32>
    %26 = tpu.iota {dimensions = array<i32: 2>} : vector<1x1x128xi32>
    %c20_i32 = arith.constant 20 : i32
    %27 = vector.broadcast %c20_i32 : i32 to vector<1x1x128xi32>
    %28 = arith.cmpi slt, %26, %27 : vector<1x1x128xi32>
    %cst_18 = arith.constant dense<0xFF800000> : vector<8x128xf32>
    %29 = vector.multi_reduction <maximumf>, %25, %cst_18 [0] : vector<2x8x128xf32> to vector<8x128xf32>
    %30 = vector.shape_cast %29 : vector<8x128xf32> to vector<1x8x128xf32>
    %cst_19 = arith.constant 0.000000e+00 : f32
    %31 = vector.shape_cast %28 : vector<1x1x128xi1> to vector<1x1x128xi1>
    %32 = vector.broadcast %31 : vector<1x1x128xi1> to vector<1x8x128xi1>
    %33 = vector.broadcast %cst_19 : f32 to vector<1x8x128xf32>
    %34 = arith.select %32, %30, %33 : vector<1x8x128xi1>, vector<1x8x128xf32>
    %35 = vector.broadcast %34 : vector<1x8x128xf32> to vector<2x8x128xf32>
    %36 = arith.subf %25, %35 : vector<2x8x128xf32>
    %37 = math.exp %36 : vector<2x8x128xf32>
    %cst_20 = arith.constant dense<0.000000e+00> : vector<8x128xf32>
    %38 = vector.multi_reduction <add>, %37, %cst_20 [0] : vector<2x8x128xf32> to vector<8x128xf32>
    %39 = vector.shape_cast %38 : vector<8x128xf32> to vector<1x8x128xf32>
    %40 = tpu.reciprocal %39 : vector<1x8x128xf32> -> vector<1x8x128xf32>
    %41 = vector.broadcast %40 : vector<1x8x128xf32> to vector<2x8x128xf32>
    %42 = arith.mulf %37, %41 : vector<2x8x128xf32>
    %43 = vector.shape_cast %28 : vector<1x1x128xi1> to vector<1x1x128xi1>
    %44 = vector.broadcast %43 : vector<1x1x128xi1> to vector<2x8x128xi1>
    %45 = arith.select %44, %42, %37 : vector<2x8x128xi1>, vector<2x8x128xf32>
    %46 = arith.truncf %45 : vector<2x8x128xf32> to vector<2x8x128xbf16>
    %c0_21 = arith.constant 0 : index
    %c0_22 = arith.constant 0 : index
    %c0_23 = arith.constant 0 : index
    %47 = vector.load %arg8[%c0_21, %c0_22, %c0_23] : memref<2x8x384xbf16, #tpu.memory_space<vmem>>, vector<2x8x128xbf16>
    tpu.vector_store %arg8[%c0_21, %c0_22, %c0_23], %46 {strides = array<i32>} : memref<2x8x384xbf16, #tpu.memory_space<vmem>>, vector<2x8x128xbf16>,
    %48 = vector.extract_strided_slice %23 {offsets = [0, 128], sizes = [16, 128], strides = [1, 1]} : vector<16x384xf32> to vector<16x128xf32>
    %49 = tpu.iota {dimensions = array<i32: 1>} : vector<1x128xi32>
    %c100_i32 = arith.constant 100 : i32
    %50 = vector.broadcast %c100_i32 : i32 to vector<1x128xi32>
    %51 = arith.cmpi sge, %49, %50 : vector<1x128xi32>
    %c120_i32 = arith.constant 120 : i32
    %52 = vector.broadcast %c120_i32 : i32 to vector<1x128xi32>
    %53 = arith.cmpi slt, %49, %52 : vector<1x128xi32>
    %54 = arith.andi %51, %53 : vector<1x128xi1>
    %cst_24 = arith.constant 5.000000e-01 : f32
    %55 = vector.broadcast %cst_24 : f32 to vector<16x128xf32>
    %56 = arith.mulf %55, %48 : vector<16x128xf32>
    %57 = vector.shape_cast %54 : vector<1x128xi1> to vector<1x128xi1>
    %58 = vector.broadcast %57 : vector<1x128xi1> to vector<16x128xi1>
    %59 = arith.select %58, %48, %56 : vector<16x128xi1>, vector<16x128xf32>
    %60 = math.tanh %59 : vector<16x128xf32>
    %cst_25 = arith.constant 1.000000e+00 : f32
    %61 = vector.broadcast %cst_25 : f32 to vector<16x128xf32>
    %62 = arith.addf %60, %61 : vector<16x128xf32>
    %cst_26 = arith.constant 5.000000e-01 : f32
    %63 = vector.broadcast %cst_26 : f32 to vector<16x128xf32>
    %64 = arith.mulf %63, %62 : vector<16x128xf32>
    %65 = vector.shape_cast %54 : vector<1x128xi1> to vector<1x128xi1>
    %66 = vector.broadcast %65 : vector<1x128xi1> to vector<16x128xi1>
    %67 = arith.select %66, %60, %64 : vector<16x128xi1>, vector<16x128xf32>
    %68 = vector.shape_cast %67 : vector<16x128xf32> to vector<2x8x128xf32>
    %69 = arith.truncf %68 : vector<2x8x128xf32> to vector<2x8x128xbf16>
    %c0_27 = arith.constant 0 : index
    %c0_28 = arith.constant 0 : index
    %c128 = arith.constant 128 : index
    %70 = vector.load %arg8[%c0_27, %c0_28, %c128] : memref<2x8x384xbf16, #tpu.memory_space<vmem>>, vector<2x8x128xbf16>
    tpu.vector_store %arg8[%c0_27, %c0_28, %c128], %69 {strides = array<i32>} : memref<2x8x384xbf16, #tpu.memory_space<vmem>>, vector<2x8x128xbf16>,
    %71 = vector.extract_strided_slice %23 {offsets = [0, 256], sizes = [16, 128], strides = [1, 1]} : vector<16x384xf32> to vector<16x128xf32>
    %72 = math.tanh %71 : vector<16x128xf32>
    %73 = vector.shape_cast %72 : vector<16x128xf32> to vector<2x8x128xf32>
    %74 = arith.truncf %73 : vector<2x8x128xf32> to vector<2x8x128xbf16>
    %c0_29 = arith.constant 0 : index
    %c0_30 = arith.constant 0 : index
    %c256 = arith.constant 256 : index
    %75 = vector.load %arg8[%c0_29, %c0_30, %c256] : memref<2x8x384xbf16, #tpu.memory_space<vmem>>, vector<2x8x128xbf16>
    tpu.vector_store %arg8[%c0_29, %c0_30, %c256], %74 {strides = array<i32>} : memref<2x8x384xbf16, #tpu.memory_space<vmem>>, vector<2x8x128xbf16>,
    return
  }
  func.func @transform_0(%arg0: i32) -> (i32, i32, i32) {
    %c0_i32 = arith.constant 0 : i32
    %c0_i32_0 = arith.constant 0 : i32
    %c0_i32_1 = arith.constant 0 : i32
    return %c0_i32, %arg0, %c0_i32_0 : i32, i32, i32
  }
  func.func @transform_1(%arg0: i32) -> (i32, i32) {
    %c0_i32 = arith.constant 0 : i32
    %c0_i32_0 = arith.constant 0 : i32
    %c0_i32_1 = arith.constant 0 : i32
    return %c0_i32, %c0_i32_0 : i32, i32
  }
  func.func @transform_2(%arg0: i32) -> (i32, i32) {
    %c0_i32 = arith.constant 0 : i32
    %c0_i32_0 = arith.constant 0 : i32
    %c0_i32_1 = arith.constant 0 : i32
    return %c0_i32, %c0_i32_0 : i32, i32
  }
  func.func @transform_3(%arg0: i32) -> (i32, i32) {
    %c0_i32 = arith.constant 0 : i32
    %c0_i32_0 = arith.constant 0 : i32
    %c0_i32_1 = arith.constant 0 : i32
    return %c0_i32, %c0_i32_0 : i32, i32
  }
  func.func @transform_4(%arg0: i32) -> (i32, i32) {
    %c0_i32 = arith.constant 0 : i32
    %c0_i32_0 = arith.constant 0 : i32
    %c0_i32_1 = arith.constant 0 : i32
    return %c0_i32, %c0_i32_0 : i32, i32
  }
  func.func @transform_5(%arg0: i32) -> (i32, i32) {
    %c0_i32 = arith.constant 0 : i32
    %c0_i32_0 = arith.constant 0 : i32
    %c0_i32_1 = arith.constant 0 : i32
    return %c0_i32, %c0_i32_0 : i32, i32
  }
  func.func @transform_6(%arg0: i32) -> (i32, i32) {
    %c0_i32 = arith.constant 0 : i32
    %c0_i32_0 = arith.constant 0 : i32
    %c0_i32_1 = arith.constant 0 : i32
    return %c0_i32, %c0_i32_0 : i32, i32
  }
  func.func @transform_7(%arg0: i32) -> (i32, i32, i32) {
    %c0_i32 = arith.constant 0 : i32
    %c0_i32_0 = arith.constant 0 : i32
    %c0_i32_1 = arith.constant 0 : i32
    return %c0_i32, %arg0, %c0_i32_0 : i32, i32, i32
  }
}

</mosaic_0001>

<llo_original>
// kernel: mlp_decoder_forward.1
$region0: #{mlp_decoder_forward.1}
  #allocation0 [shape = 'u32[]', space=smem, size = 0x4, offset = 0x4, fixed_abs, tag = 'smem constant byte address 0x4 - core index']
  #allocation1 [shape = 'u32[144,128]{1,0:T(1,128)}', space=vmem, size = 0x12000, scoped, tag = 'internal scratch']
  %s0 = inlined_call_operand.hbm [shape: f32[2,8,128], index: 0, kind: input, shape index: {}]
  %s1 = inlined_call_operand.hbm [shape: bf16[128,128], index: 1, kind: input, shape index: {}]
  %s2 = inlined_call_operand.vmem [shape: f32[1,128], index: 2, kind: input, shape index: {}]
  %s3 = inlined_call_operand.vmem [shape: bf16[128,64], index: 3, kind: input, shape index: {}]
  %s4 = inlined_call_operand.vmem [shape: f32[1,64], index: 4, kind: input, shape index: {}]
  %s5 = inlined_call_operand.vmem [shape: bf16[64,384], index: 5, kind: input, shape index: {}]
  %s6 = inlined_call_operand.vmem [shape: f32[1,384], index: 6, kind: input, shape index: {}]
  %s7 = inlined_call_operand.vmem [shape: bf16[2,8,384], index: 7, kind: output, shape index: {}]
  %s8 = sld [smem:[#allocation0]]
  $region46: #{mlp_decoder_forward.1} parent=0
    _
  %s10 = ssub.s32 1, %s8
  %s11 = scalar_select 0, %s10, %s8
  $region1: #{mlp_decoder_forward.1} parent=0
    #allocation2 [shape = 'u8[8192]{0}', space=vmem, size = 0x2000, scoped, tag = 'input window, operand 0, single buffered']
    #allocation3 [shape = 's32[1]{0}', space=sflag, size = 0x4, scoped, tag = 'scoped memory for mlp_decoder_forward.1']
    #allocation4 [shape = 'u8[32768]{0}', space=vmem, size = 0x8000, scoped, tag = 'input window, operand 1, single buffered']
    #allocation5 [shape = 's32[1]{0}', space=sflag, size = 0x4, scoped, tag = 'scoped memory for mlp_decoder_forward.1']
    %12 = vsyncpa [#allocation3], 0
    %13 = vsyncpa [#allocation5], 0
    // Predicated region
    $region2: #{mlp_decoder_forward.1} parent=1 // pred_check
      _
    $region3: #{mlp_decoder_forward.1} parent=1 // pred_check_branch
      %15 = sbr.rel (0) target = $region5
    $region4: #{mlp_decoder_forward.1} parent=1 // pred_region
      %s17 = ssub.s32 256, 256
      %18 = vsyncadd [#allocation3], %s17
      %s19 = sshll.u32 [#allocation2], 4
      %s20 = int_to_ptr.vmem [resolvable:$true] %s19
      %25 = dma.hbm_to_vmem [thread:$0]  %s0, 256, %s20, [#allocation3], 128, 128, 8
    $region5: #{mlp_decoder_forward.1} parent=1 // pred_fallthru
      _
    // Predicated region
    $region6: #{mlp_decoder_forward.1} parent=1 // pred_check
      _
    $region7: #{mlp_decoder_forward.1} parent=1 // pred_check_branch
      %27 = sbr.rel (0) target = $region9
    $region8: #{mlp_decoder_forward.1} parent=1 // pred_region
      %s29 = ssub.s32 1024, 1024
      %30 = vsyncadd [#allocation5], %s29
      %s31 = sshll.u32 [#allocation4], 4
      %s32 = int_to_ptr.vmem [resolvable:$true] %s31
      %37 = dma.hbm_to_vmem [thread:$0]  %s1, 1024, %s32, [#allocation5], 64, 64, 4
    $region9: #{mlp_decoder_forward.1} parent=1 // pred_fallthru
      _
    // Predicated region
    $region10: #{mlp_decoder_forward.1} parent=1 // pred_check
      _
    $region11: #{mlp_decoder_forward.1} parent=1 // pred_check_branch
      %39 = sbr.rel (0) target = $region13
    $region12: #{mlp_decoder_forward.1} parent=1 // pred_region
      _
    $region13: #{mlp_decoder_forward.1} parent=1 // pred_fallthru
      _
    // Predicated region
    $region14: #{mlp_decoder_forward.1} parent=1 // pred_check
      _
    $region15: #{mlp_decoder_forward.1} parent=1 // pred_check_branch
      %41 = sbr.rel (0) target = $region17
    $region16: #{mlp_decoder_forward.1} parent=1 // pred_region
      _
    $region17: #{mlp_decoder_forward.1} parent=1 // pred_fallthru
      _
    // Predicated region
    $region18: #{mlp_decoder_forward.1} parent=1 // pred_check
      _
    $region19: #{mlp_decoder_forward.1} parent=1 // pred_check_branch
      %43 = sbr.rel (0) target = $region21
    $region20: #{mlp_decoder_forward.1} parent=1 // pred_region
      _
    $region21: #{mlp_decoder_forward.1} parent=1 // pred_fallthru
      _
    // Predicated region
    $region22: #{mlp_decoder_forward.1} parent=1 // pred_check
      _
    $region23: #{mlp_decoder_forward.1} parent=1 // pred_check_branch
      %45 = sbr.rel (0) target = $region25
    $region24: #{mlp_decoder_forward.1} parent=1 // pred_region
      _
    $region25: #{mlp_decoder_forward.1} parent=1 // pred_fallthru
      _
    // Predicated region
    $region26: #{mlp_decoder_forward.1} parent=1 // pred_check
      _
    $region27: #{mlp_decoder_forward.1} parent=1 // pred_check_branch
      %47 = sbr.rel (0) target = $region29
    $region28: #{mlp_decoder_forward.1} parent=1 // pred_region
      _
    $region29: #{mlp_decoder_forward.1} parent=1 // pred_fallthru
      _
    // Predicated region
    $region30: #{mlp_decoder_forward.1} parent=1 // pred_check
      _
    $region31: #{mlp_decoder_forward.1} parent=1 // pred_check_branch
      %49 = sbr.rel (0) target = $region33
    $region32: #{mlp_decoder_forward.1} parent=1 // pred_region
      %50 = dma.done [#allocation3], 256
    $region33: #{mlp_decoder_forward.1} parent=1 // pred_fallthru
      _
    // Predicated region
    $region34: #{mlp_decoder_forward.1} parent=1 // pred_check
      _
    $region35: #{mlp_decoder_forward.1} parent=1 // pred_check_branch
      %52 = sbr.rel (0) target = $region37
    $region36: #{mlp_decoder_forward.1} parent=1 // pred_region
      %53 = dma.done [#allocation5], 1024
    $region37: #{mlp_decoder_forward.1} parent=1 // pred_fallthru
      _
    %v55 = vld [vmem:[#allocation2] sm:$0xff]
    %v56 = vld [vmem:[#allocation2 + $0x8] sm:$0xff]
    %v57 = vpack.c.bf16 %v55, %v55
    %v58 = vpack.c.bf16 %v56, %v56
    %v59 = vld [vmem:[#allocation4] sm:$0xf]
    %v60 = vld [vmem:[#allocation4 + $0x4] sm:$0xf]
    %v61 = vld [vmem:[#allocation4 + $0x8] sm:$0xf]
    %v62 = vld [vmem:[#allocation4 + $0xc] sm:$0xf]
    %v63 = vld [vmem:[#allocation4 + $0x10] sm:$0xf]
    %v64 = vld [vmem:[#allocation4 + $0x14] sm:$0xf]
    %v65 = vld [vmem:[#allocation4 + $0x18] sm:$0xf]
    %v66 = vld [vmem:[#allocation4 + $0x1c] sm:$0xf]
    %v67 = vld [vmem:[#allocation4 + $0x20] sm:$0xf]
    %v68 = vld [vmem:[#allocation4 + $0x24] sm:$0xf]
    %v69 = vld [vmem:[#allocation4 + $0x28] sm:$0xf]
    %v70 = vld [vmem:[#allocation4 + $0x2c] sm:$0xf]
    %v71 = vld [vmem:[#allocation4 + $0x30] sm:$0xf]
    %v72 = vld [vmem:[#allocation4 + $0x34] sm:$0xf]
    %v73 = vld [vmem:[#allocation4 + $0x38] sm:$0xf]
    %v74 = vld [vmem:[#allocation4 + $0x3c] sm:$0xf]
    %v75 = vld [vmem:[%s2] sm:$0x1]
    %v77 = vlaneseq
    %v78 = vshrl.u32 %v77, 7
    %v79 = vsub.s32 0, %v78
    %v80 = vrot.slane %v75, %v79
    %v84 = vunpack.c.l.b16 %v57
    %v85 = vunpack.c.l.b16 %v58
    %v86 = vpack.c.b16 %v85, %v84
    %v104 = vunpack.c.l.b16 %v59
    %v105 = vunpack.c.l.b16 %v60
    %v106 = vunpack.c.l.b16 %v61
    %v107 = vunpack.c.l.b16 %v62
    %v108 = vunpack.c.l.b16 %v63
    %v109 = vunpack.c.l.b16 %v64
    %v110 = vunpack.c.l.b16 %v65
    %v111 = vunpack.c.l.b16 %v66
    %v112 = vunpack.c.l.b16 %v67
    %v113 = vunpack.c.l.b16 %v68
    %v114 = vunpack.c.l.b16 %v69
    %v115 = vunpack.c.l.b16 %v70
    %v116 = vunpack.c.l.b16 %v71
    %v117 = vunpack.c.l.b16 %v72
    %v118 = vunpack.c.l.b16 %v73
    %v119 = vunpack.c.l.b16 %v74
    %v120 = vpack.c.b16 %v105, %v104
    %v121 = vpack.c.b16 %v107, %v106
    %v122 = vpack.c.b16 %v109, %v108
    %v123 = vpack.c.b16 %v111, %v110
    %v124 = vpack.c.b16 %v113, %v112
    %v125 = vpack.c.b16 %v115, %v114
    %v126 = vpack.c.b16 %v117, %v116
    %v127 = vpack.c.b16 %v119, %v118
    %136 = vmatprep.subr.bf16.mxu0 0
    %137 = vmatpush1.bf16.msra.mxu0 %v127
    %138 = vmatprep.subr.bf16.mxu0 0
    %139 = vmatpush1.bf16.msra.mxu0 %v126
    %140 = vmatprep.subr.bf16.mxu0 0
    %141 = vmatpush1.bf16.msra.mxu0 %v125
    %142 = vmatprep.subr.bf16.mxu0 0
    %143 = vmatpush1.bf16.msra.mxu0 %v124
    %144 = vmatprep.subr.bf16.mxu0 0
    %145 = vmatpush1.bf16.msra.mxu0 %v123
    %146 = vmatprep.subr.bf16.mxu0 0
    %147 = vmatpush1.bf16.msra.mxu0 %v122
    %148 = vmatprep.subr.bf16.mxu0 0
    %149 = vmatpush1.bf16.msra.mxu0 %v121
    %150 = vmatprep.subr.bf16.mxu0 0
    %151 = vmatpush1.bf16.msra.mxu0 %v120
    %152 = vmatprep.subr.bf16.mxu0 0
    %153 = vmatpush2.bf16.msra.mxu0 0
    %154 = vmatprep.subr.bf16.mxu0 0
    %155 = vmatpush2.bf16.msra.mxu0 0
    %156 = vmatprep.subr.bf16.mxu0 0
    %157 = vmatpush2.bf16.msra.mxu0 0
    %158 = vmatprep.subr.bf16.mxu0 0
    %159 = vmatpush2.bf16.msra.mxu0 0
    %160 = vmatprep.subr.bf16.mxu0 0
    %161 = vmatpush2.bf16.msra.mxu0 0
    %162 = vmatprep.subr.bf16.mxu0 0
    %163 = vmatpush2.bf16.msra.mxu0 0
    %164 = vmatprep.subr.bf16.mxu0 0
    %165 = vmatpush2.bf16.msra.mxu0 0
    %166 = vmatprep.subr.bf16.mxu0 0
    %167 = vmatpush2.bf16.msra.mxu0 0
    %168 = vmatprep.mubr.bf16.mxu0 0
    %169 = vmatmul.mubr.bf16.gmra.mxu0 %v86
    %v170 = vpop.f32.mrf.mxu0
    %v171 = vadd.f32 %v80, %v170
    %v172 = vpop.f32.mrf.mxu0
    %v173 = vpop.f32.mrf.mxu0
    %v174 = vadd.f32 %v80, %v173
    %v175 = vpop.f32.mrf.mxu0
    %176 = vdwg.mxu0
    %v177 = vmax.f32 %v171, 0.0
    %v178 = vmax.f32 %v174, 0.0
    %v179 = vpack.c.bf16 %v178, %v177
    %v180 = vld [vmem:[%s3] sm:$0xf]
    %v181 = vld [vmem:[%s3 + $0x4] sm:$0xf]
    %v182 = vld [vmem:[%s3 + $0x8] sm:$0xf]
    %v183 = vld [vmem:[%s3 + $0xc] sm:$0xf]
    %v184 = vld [vmem:[%s3 + $0x10] sm:$0xf]
    %v185 = vld [vmem:[%s3 + $0x14] sm:$0xf]
    %v186 = vld [vmem:[%s3 + $0x18] sm:$0xf]
    %v187 = vld [vmem:[%s3 + $0x1c] sm:$0xf]
    %v188 = vld [vmem:[%s3 + $0x20] sm:$0xf]
    %v189 = vld [vmem:[%s3 + $0x24] sm:$0xf]
    %v190 = vld [vmem:[%s3 + $0x28] sm:$0xf]
    %v191 = vld [vmem:[%s3 + $0x2c] sm:$0xf]
    %v192 = vld [vmem:[%s3 + $0x30] sm:$0xf]
    %v193 = vld [vmem:[%s3 + $0x34] sm:$0xf]
    %v194 = vld [vmem:[%s3 + $0x38] sm:$0xf]
    %v195 = vld [vmem:[%s3 + $0x3c] sm:$0xf]
    %v196 = vld [vmem:[%s4] sm:$0x1]
    %v198 = vlaneseq
    %v199 = vshrl.u32 %v198, 7
    %v200 = vsub.s32 0, %v199
    %v201 = vrot.slane %v196, %v200
    %v219 = vunpack.c.l.b16 %v180
    %v220 = vunpack.c.l.b16 %v181
    %v221 = vunpack.c.l.b16 %v182
    %v222 = vunpack.c.l.b16 %v183
    %v223 = vunpack.c.l.b16 %v184
    %v224 = vunpack.c.l.b16 %v185
    %v225 = vunpack.c.l.b16 %v186
    %v226 = vunpack.c.l.b16 %v187
    %v227 = vunpack.c.l.b16 %v188
    %v228 = vunpack.c.l.b16 %v189
    %v229 = vunpack.c.l.b16 %v190
    %v230 = vunpack.c.l.b16 %v191
    %v231 = vunpack.c.l.b16 %v192
    %v232 = vunpack.c.l.b16 %v193
    %v233 = vunpack.c.l.b16 %v194
    %v234 = vunpack.c.l.b16 %v195
    %v235 = vpack.c.b16 %v220, %v219
    %v236 = vpack.c.b16 %v222, %v221
    %v237 = vpack.c.b16 %v224, %v223
    %v238 = vpack.c.b16 %v226, %v225
    %v239 = vpack.c.b16 %v228, %v227
    %v240 = vpack.c.b16 %v230, %v229
    %v241 = vpack.c.b16 %v232, %v231
    %v242 = vpack.c.b16 %v234, %v233
    %251 = vmatprep.subr.bf16.mxu0 0
    %252 = vmatpush1.bf16.msra.mxu0 %v242
    %253 = vmatprep.subr.bf16.mxu0 0
    %254 = vmatpush1.bf16.msra.mxu0 %v241
    %255 = vmatprep.subr.bf16.mxu0 0
    %256 = vmatpush1.bf16.msra.mxu0 %v240
    %257 = vmatprep.subr.bf16.mxu0 0
    %258 = vmatpush1.bf16.msra.mxu0 %v239
    %259 = vmatprep.subr.bf16.mxu0 0
    %260 = vmatpush1.bf16.msra.mxu0 %v238
    %261 = vmatprep.subr.bf16.mxu0 0
    %262 = vmatpush1.bf16.msra.mxu0 %v237
    %263 = vmatprep.subr.bf16.mxu0 0
    %264 = vmatpush1.bf16.msra.mxu0 %v236
    %265 = vmatprep.subr.bf16.mxu0 0
    %266 = vmatpush1.bf16.msra.mxu0 %v235
    %267 = vmatprep.subr.bf16.mxu0 0
    %268 = vmatpush2.bf16.msra.mxu0 0
    %269 = vmatprep.subr.bf16.mxu0 0
    %270 = vmatpush2.bf16.msra.mxu0 0
    %271 = vmatprep.subr.bf16.mxu0 0
    %272 = vmatpush2.bf16.msra.mxu0 0
    %273 = vmatprep.subr.bf16.mxu0 0
    %274 = vmatpush2.bf16.msra.mxu0 0
    %275 = vmatprep.subr.bf16.mxu0 0
    %276 = vmatpush2.bf16.msra.mxu0 0
    %277 = vmatprep.subr.bf16.mxu0 0
    %278 = vmatpush2.bf16.msra.mxu0 0
    %279 = vmatprep.subr.bf16.mxu0 0
    %280 = vmatpush2.bf16.msra.mxu0 0
    %281 = vmatprep.subr.bf16.mxu0 0
    %282 = vmatpush2.bf16.msra.mxu0 0
    %283 = vmatprep.mubr.bf16.mxu0 0
    %284 = vmatmul.mubr.bf16.gmra.mxu0 %v179
    %v285 = vpop.f32.mrf.mxu0
    %v286 = vadd.f32 %v201, %v285
    %v287 = vpop.f32.mrf.mxu0
    %v288 = vpop.f32.mrf.mxu0
    %v289 = vadd.f32 %v201, %v288
    %v290 = vpop.f32.mrf.mxu0
    %291 = vdwg.mxu0
    %v292 = vmax.f32 %v286, 0.0
    %v293 = vmax.f32 %v289, 0.0
    %v294 = vpack.c.bf16 %v293, %v292
    %v295 = vld [vmem:[%s5] sm:$0xff]
    %v296 = vld [vmem:[%s5 + $0x8] sm:$0xf]
    %v297 = vld [vmem:[%s5 + $0xc] sm:$0xff]
    %v298 = vld [vmem:[%s5 + $0x14] sm:$0xf]
    %v299 = vld [vmem:[%s5 + $0x18] sm:$0xff]
    %v300 = vld [vmem:[%s5 + $0x20] sm:$0xf]
    %v301 = vld [vmem:[%s5 + $0x24] sm:$0xff]
    %v302 = vld [vmem:[%s5 + $0x2c] sm:$0xf]
    %v303 = vld [vmem:[%s5 + $0x30] sm:$0xff]
    %v304 = vld [vmem:[%s5 + $0x38] sm:$0xf]
    %v305 = vld [vmem:[%s5 + $0x3c] sm:$0xff]
    %v306 = vld [vmem:[%s5 + $0x44] sm:$0xf]
    %v307 = vld [vmem:[%s5 + $0x48] sm:$0xff]
    %v308 = vld [vmem:[%s5 + $0x50] sm:$0xf]
    %v309 = vld [vmem:[%s5 + $0x54] sm:$0xff]
    %v310 = vld [vmem:[%s5 + $0x5c] sm:$0xf]
    %v311 = vld [vmem:[%s6] sm:$0x7]
    %v313 = vlaneseq
    %v314 = vshrl.u32 %v313, 7
    %v315 = vsub.s32 0, %v314
    %v316 = vrot.slane %v311, %v315
    %v317 = vlaneseq
    %v318 = vshrl.u32 %v317, 7
    %v319 = vsub.s32 1, %v318
    %v320 = vrot.slane %v311, %v319
    %v321 = vlaneseq
    %v322 = vshrl.u32 %v321, 7
    %v323 = vsub.s32 2, %v322
    %v324 = vrot.slane %v311, %v323
    %v344 = vunpack.c.l.b16 %v295
    %v345 = vunpack.c.h.b16 %v295
    %v346 = vunpack.c.l.b16 %v296
    %v347 = vunpack.c.l.b16 %v297
    %v348 = vunpack.c.h.b16 %v297
    %v349 = vunpack.c.l.b16 %v298
    %v350 = vunpack.c.l.b16 %v299
    %v351 = vunpack.c.h.b16 %v299
    %v352 = vunpack.c.l.b16 %v300
    %v353 = vunpack.c.l.b16 %v301
    %v354 = vunpack.c.h.b16 %v301
    %v355 = vunpack.c.l.b16 %v302
    %v356 = vunpack.c.l.b16 %v303
    %v357 = vunpack.c.h.b16 %v303
    %v358 = vunpack.c.l.b16 %v304
    %v359 = vunpack.c.l.b16 %v305
    %v360 = vunpack.c.h.b16 %v305
    %v361 = vunpack.c.l.b16 %v306
    %v362 = vunpack.c.l.b16 %v307
    %v363 = vunpack.c.h.b16 %v307
    %v364 = vunpack.c.l.b16 %v308
    %v365 = vunpack.c.l.b16 %v309
    %v366 = vunpack.c.h.b16 %v309
    %v367 = vunpack.c.l.b16 %v310
    %v368 = vpack.c.b16 %v347, %v344
    %v369 = vpack.c.b16 %v348, %v345
    %v370 = vpack.c.b16 %v349, %v346
    %v371 = vpack.c.b16 %v353, %v350
    %v372 = vpack.c.b16 %v354, %v351
    %v373 = vpack.c.b16 %v355, %v352
    %v374 = vpack.c.b16 %v359, %v356
    %v375 = vpack.c.b16 %v360, %v357
    %v376 = vpack.c.b16 %v361, %v358
    %v377 = vpack.c.b16 %v365, %v362
    %v378 = vpack.c.b16 %v366, %v363
    %v379 = vpack.c.b16 %v367, %v364
    %vm392 = vcmask 523264
    %v394 = vsel %vm392, %v294, 0
    %396 = vmatprep.subr.bf16.mxu0 0
    %397 = vmatpush1.bf16.msra.mxu0 0
    %398 = vmatprep.subr.bf16.mxu0 0
    %399 = vmatpush1.bf16.msra.mxu0 0
    %400 = vmatprep.subr.bf16.mxu0 0
    %401 = vmatpush1.bf16.msra.mxu0 0
    %402 = vmatprep.subr.bf16.mxu0 0
    %403 = vmatpush1.bf16.msra.mxu0 0
    %404 = vmatprep.subr.bf16.mxu0 %v378
    %405 = vmatpush1.bf16.msra.mxu0 %v377
    %406 = vmatprep.subr.bf16.mxu0 %v375
    %407 = vmatpush1.bf16.msra.mxu0 %v374
    %408 = vmatprep.subr.bf16.mxu0 %v372
    %409 = vmatpush1.bf16.msra.mxu0 %v371
    %410 = vmatprep.subr.bf16.mxu0 %v369
    %411 = vmatpush1.bf16.msra.mxu0 %v368
    %412 = vmatprep.subr.bf16.mxu0 0
    %413 = vmatpush2.bf16.msra.mxu0 0
    %414 = vmatprep.subr.bf16.mxu0 0
    %415 = vmatpush2.bf16.msra.mxu0 0
    %416 = vmatprep.subr.bf16.mxu0 0
    %417 = vmatpush2.bf16.msra.mxu0 0
    %418 = vmatprep.subr.bf16.mxu0 0
    %419 = vmatpush2.bf16.msra.mxu0 0
    %420 = vmatprep.subr.bf16.mxu0 0
    %421 = vmatpush2.bf16.msra.mxu0 0
    %422 = vmatprep.subr.bf16.mxu0 0
    %423 = vmatpush2.bf16.msra.mxu0 0
    %424 = vmatprep.subr.bf16.mxu0 0
    %425 = vmatpush2.bf16.msra.mxu0 0
    %426 = vmatprep.subr.bf16.mxu0 0
    %427 = vmatpush2.bf16.msra.mxu0 0
    %428 = vmatprep.mubr.bf16.mxu0 0
    %429 = vmatmul.mubr.bf16.gmra.mxu0 %v394
    %v430 = vpop.f32.mrf.mxu0
    %v431 = vadd.f32 %v316, %v430
    %v432 = vpop.f32.mrf.mxu0
    %v433 = vadd.f32 %v320, %v432
    %v434 = vpop.f32.mrf.mxu0
    %v435 = vadd.f32 %v316, %v434
    %v436 = vpop.f32.mrf.mxu0
    %v437 = vadd.f32 %v320, %v436
    %438 = vdwg.mxu0
    %439 = vmatprep.subr.bf16.mxu0 0
    %440 = vmatpush1.bf16.msra.mxu0 0
    %441 = vmatprep.subr.bf16.mxu0 0
    %442 = vmatpush1.bf16.msra.mxu0 0
    %443 = vmatprep.subr.bf16.mxu0 0
    %444 = vmatpush1.bf16.msra.mxu0 0
    %445 = vmatprep.subr.bf16.mxu0 0
    %446 = vmatpush1.bf16.msra.mxu0 0
    %447 = vmatprep.subr.bf16.mxu0 0
    %448 = vmatpush1.bf16.msra.mxu0 %v379
    %449 = vmatprep.subr.bf16.mxu0 0
    %450 = vmatpush1.bf16.msra.mxu0 %v376
    %451 = vmatprep.subr.bf16.mxu0 0
    %452 = vmatpush1.bf16.msra.mxu0 %v373
    %453 = vmatprep.subr.bf16.mxu0 0
    %454 = vmatpush1.bf16.msra.mxu0 %v370
    %455 = vmatprep.subr.bf16.mxu0 0
    %456 = vmatpush2.bf16.msra.mxu0 0
    %457 = vmatprep.subr.bf16.mxu0 0
    %458 = vmatpush2.bf16.msra.mxu0 0
    %459 = vmatprep.subr.bf16.mxu0 0
    %460 = vmatpush2.bf16.msra.mxu0 0
    %461 = vmatprep.subr.bf16.mxu0 0
    %462 = vmatpush2.bf16.msra.mxu0 0
    %463 = vmatprep.subr.bf16.mxu0 0
    %464 = vmatpush2.bf16.msra.mxu0 0
    %465 = vmatprep.subr.bf16.mxu0 0
    %466 = vmatpush2.bf16.msra.mxu0 0
    %467 = vmatprep.subr.bf16.mxu0 0
    %468 = vmatpush2.bf16.msra.mxu0 0
    %469 = vmatprep.subr.bf16.mxu0 0
    %470 = vmatpush2.bf16.msra.mxu0 0
    %471 = vmatprep.mubr.bf16.mxu0 0
    %472 = vmatmul.mubr.bf16.gmra.mxu0 %v394
    %v473 = vpop.f32.mrf.mxu0
    %v474 = vadd.f32 %v324, %v473
    %v475 = vpop.f32.mrf.mxu0
    %v476 = vpop.f32.mrf.mxu0
    %v477 = vadd.f32 %v324, %v476
    %v478 = vpop.f32.mrf.mxu0
    %479 = vdwg.mxu0
    %v480 = vlaneseq
    %v481 = vand.u32 %v480, 127
    %vm482 = vcmp.lt.s32.totalorder %v481, 20
    %v483 = vmax.f32 %v431, %v435
    %v484 = vsel %vm482, 1, 0
    %vm485 = vcmp.eq.s32.totalorder %v484, 1
    %v486 = vsel %vm485, %v483, 0.0
    %v487 = vsub.f32 %v431, %v486
    %v488 = vsub.f32 %v435, %v486
    %v489 = vmul.f32 %v487, 1.442695
    %v490 = vpow.pop %v489
    %v491 = vmul.f32 %v488, 1.442695
    %v492 = vpow.pop %v491
    %v493 = vadd.f32 %v490, %v492
    %v494 = vrcp.pop %v493
    %v495 = vmul.f32 %v490, %v494
    %v496 = vmul.f32 %v492, %v494
    %v497 = vsel %vm485, %v495, %v490
    %v498 = vsel %vm485, %v496, %v492
    %v499 = vpack.c.bf16 %v497, %v497
    %v500 = vpack.c.bf16 %v498, %v498
    %501 = vst [vmem:[%s7] sm:$0xf] %v499
    %502 = vst [vmem:[%s7 + $0xc] sm:$0xf] %v500
    %vm503 = vcmp.ge.s32.totalorder %v481, 100
    %vm504 = vcmp.lt.s32.totalorder %v481, 120
    %vm505 = vmand %vm503, %vm504
    %v506 = vmul.f32 %v433, 0.5
    %v507 = vmul.f32 %v437, 0.5
    %v508 = vsel %vm505, 1, 0
    %vm509 = vcmp.eq.s32.totalorder %v508, 1
    %v510 = vsel %vm509, %v433, %v506
    %v511 = vsel %vm509, %v437, %v507
    %v512 = vtanh.pop %v510
    %v513 = vtanh.pop %v511
    %v514 = vadd.f32 %v512, 1.0
    %v515 = vadd.f32 %v513, 1.0
    %v516 = vmul.f32 %v514, 0.5
    %v517 = vmul.f32 %v515, 0.5
    %v518 = vsel %vm509, %v512, %v516
    %v519 = vsel %vm509, %v513, %v517
    %v520 = vpack.c.bf16 %v518, %v518
    %v521 = vpack.c.bf16 %v519, %v519
    %522 = vst [vmem:[%s7 + $0x4] sm:$0xf] %v520
    %523 = vst [vmem:[%s7 + $0x10] sm:$0xf] %v521
    %v524 = vtanh.pop %v474
    %v525 = vtanh.pop %v477
    %v526 = vpack.c.bf16 %v524, %v524
    %v527 = vpack.c.bf16 %v525, %v525
    %528 = vst [vmem:[%s7 + $0x8] sm:$0xf] %v526
    %529 = vst [vmem:[%s7 + $0x14] sm:$0xf] %v527
    // Predicated region
    $region38: #{mlp_decoder_forward.1} parent=1 // pred_check
      _
    $region39: #{mlp_decoder_forward.1} parent=1 // pred_check_branch
      %531 = sbr.rel (0) target = $region41
    $region40: #{mlp_decoder_forward.1} parent=1 // pred_region
      _
    $region41: #{mlp_decoder_forward.1} parent=1 // pred_fallthru
      _
    // Predicated region
    $region42: #{mlp_decoder_forward.1} parent=1 // pred_check
      _
    $region43: #{mlp_decoder_forward.1} parent=1 // pred_check_branch
      %533 = sbr.rel (0) target = $region45
    $region44: #{mlp_decoder_forward.1} parent=1 // pred_region
      _
    $region45: #{mlp_decoder_forward.1} parent=1 // pred_fallthru
      _
    %534 = vsyncpa [#allocation3], 1
    %535 = vsyncpa [#allocation5], 1

</llo_original>
